<compile_context>
chip_gen: v7x
topology: tpu7x:2x2x1
jax: 0.10.0
libtpu: 0.0.40
codegen_flags: <defaults>
</compile_context>

<pallas_src>
import functools

import jax
import jax.numpy as jnp
from jax.experimental import pallas as pl
from jax.experimental.pallas import tpu as pltpu


# ----------------------------------------------------------------------------
# Helpers
# ----------------------------------------------------------------------------

def _round_up(v: int, m: int) -> int:
    return (v + m - 1) // m * m


def _sublane(itemsize: int) -> int:
    # f32 -> 8, bf16 -> 16, int8 -> 32
    return 8 * max(1, 4 // max(1, itemsize))


def _vmem_cap_bytes() -> int:
    """Physical VMEM capacity; conservative 64 MiB (v7x) fallback."""
    try:
        return int(pltpu.get_tpu_info().vmem_capacity_bytes)
    except Exception:
        return 64 << 20


def _vmem_limit(need: int, cap: int) -> int:
    """Explicit scoped-VMEM limit: >= need + headroom, <= 0.75 * physical."""
    limit = min(int(0.75 * cap), max(need + (3 << 20), 16 << 20))
    limit = max(limit, need)
    return int(min(limit, int(0.9 * cap)))


def _lowest_value(dtype):
    dtype = jnp.dtype(dtype)
    if jnp.issubdtype(dtype, jnp.floating):
        return float("-inf")
    return int(jnp.iinfo(dtype).min)


def _choose_tb(bs: int, unit_bytes: int, budget: int, sub: int):
    """Largest divisor TB of bs such that:
         * output block (TB, 2*D) obeys the sublane rule (TB == bs or TB % sub == 0),
         * TB * unit_bytes fits the per-buffer VMEM budget,
       preferring TBs that give a grid of >= 2 steps (even step count preferred)
       so megacore sharding and DMA/compute overlap actually kick in on v7x.
       Returns None if nothing fits (caller switches to the node-chunked path).
    """
    cands = []
    for t in range(1, bs + 1):
        if bs % t:
            continue
        if t != bs and t % sub:
            continue
        if t * unit_bytes > budget:
            continue
        cands.append(t)
    if not cands:
        return None
    multi = [t for t in cands if bs // t >= 2]
    if multi:
        even = [t for t in multi if (bs // t) % 2 == 0]
        return max(even) if even else max(multi)
    return max(cands)


# ----------------------------------------------------------------------------
# Kernels
# ----------------------------------------------------------------------------

def _cat_max_sum_kernel(x_ref, o_ref):
    """One grid step handles TB whole graphs.

    x_ref : (TB, num_node, D) VMEM tile
    o_ref : (TB, 2*D) output tile; max stored in [:, :D], sum in [:, D:].
    """
    x = x_ref[...]
    d = x_ref.shape[-1]
    o_ref[:, :d] = jnp.max(x, axis=1).astype(o_ref.dtype)
    # fp32 accumulation regardless of input dtype (widening accounted in VMEM).
    o_ref[:, d:] = jnp.sum(x, axis=1, dtype=jnp.float32).astype(o_ref.dtype)


def _cat_max_sum_chunked_kernel(x_ref, o_ref, max_acc, sum_acc, *, num_node):
    """Node-chunked reduction: grid = (bs//TB, n_chunks).

    x_ref   : (TB, TN, D) chunk tile
    o_ref   : (TB, 2*D) output block, resident across the chunk axis
    max_acc : (TB, D) running max (input dtype, exact)
    sum_acc : (TB, D) fp32 running sum
    """
    c = pl.program_id(1)
    tn = x_ref.shape[1]
    d = x_ref.shape[-1]

    @pl.when(c == 0)
    def _():
        max_acc[...] = jnp.full_like(max_acc, _lowest_value(max_acc.dtype))
        sum_acc[...] = jnp.zeros_like(sum_acc)

    x = x_ref[...]
    if num_node % tn != 0:
        # Tail chunk extends past the node axis; Pallas pads the read with
        # unspecified data, so mask those rows out.
        idx = jax.lax.broadcasted_iota(jnp.int32, (tn, d), 0)
        valid = (idx + c * tn) < num_node                       # (TN, D)
        x_max = jnp.where(valid[None, :, :], x,
                          jnp.asarray(_lowest_value(x.dtype), x.dtype))
        x_sum = jnp.where(valid[None, :, :], x, jnp.zeros((), x.dtype))
    else:
        x_max = x
        x_sum = x

    max_acc[...] = jnp.maximum(max_acc[...], jnp.max(x_max, axis=1))
    sum_acc[...] = sum_acc[...] + jnp.sum(x_sum, axis=1, dtype=jnp.float32)

    @pl.when(c == pl.num_programs(1) - 1)
    def _():
        o_ref[:, :d] = max_acc[...].astype(o_ref.dtype)
        o_ref[:, d:] = sum_acc[...].astype(o_ref.dtype)


# ----------------------------------------------------------------------------
# Wrapper
# ----------------------------------------------------------------------------

def cat_max_sum_pallas(x: jax.Array, bs: int, *, tb: int | None = None,
                       tn: int | None = None,
                       vmem_budget_bytes: int = 6 << 20) -> jax.Array:
    """Pallas equivalent of cat_max_sum for equal-size graphs.

    x  : [bs * num_node, D]
    bs : number of graphs (static Python int)
    tb : graphs per grid step (optional override; must divide bs)
    tn : node-chunk size (optional; forces the chunked-reduction path)
    returns [bs, 2*D] = concat(max over nodes, sum over nodes)
    """
    n_total, d = x.shape
    assert n_total % bs == 0, "cat_max_sum assumes equal-size graphs"
    num_node = n_total // bs
    itemsize = jnp.dtype(x.dtype).itemsize
    sub = _sublane(itemsize)

    cap = _vmem_cap_bytes()
    budget = int(min(vmem_budget_bytes, cap // 10))   # per-buffer budget

    padded_nn = _round_up(num_node, sub)              # physical sublane padding
    per_graph = padded_nn * d * itemsize

    # Free row-major reshape: [bs*num_node, D] -> [bs, num_node, D].
    x3 = x.reshape(bs, num_node, d)
    out_shape = jax.ShapeDtypeStruct((bs, 2 * d), x.dtype)

    chunked = tn is not None
    if not chunked and tb is None:
        tb = _choose_tb(bs, per_graph, budget, sub)
        if tb is None:                                # single graph too big
            chunked = True

    if not chunked:
        # ----- flat path: whole graphs per step ------------------------------
        assert bs % tb == 0 and (tb == bs or tb % sub == 0)
        in_tile = tb * padded_nn * d * itemsize
        widen = tb * padded_nn * d * 4 if itemsize < 4 else 0   # f32 sum temp
        out_tile = _round_up(tb, sub) * 2 * _round_up(d, 128) * itemsize
        need = 2 * in_tile + 2 * out_tile + widen + (1 << 20)

        return pl.pallas_call(
            _cat_max_sum_kernel,
            out_shape=out_shape,
            grid=(bs // tb,),
            in_specs=[pl.BlockSpec((tb, num_node, d), lambda b: (b, 0, 0))],
            out_specs=pl.BlockSpec((tb, 2 * d), lambda b: (b, 0)),
            compiler_params=pltpu.CompilerParams(
                dimension_semantics=("parallel",),
                vmem_limit_bytes=_vmem_limit(need, cap)),
        )(x3)

    # ----- chunked path: node axis tiled as a reduction grid axis ------------
    if tb is None:
        tb = _choose_tb(bs, sub * d * itemsize, budget, sub)
        if tb is None:
            tb = bs
    assert bs % tb == 0 and (tb == bs or tb % sub == 0)
    if tn is None:
        tn = max(sub, (budget // max(1, tb * d * itemsize)) // sub * sub)
    tn = int(min(_round_up(int(tn), sub), padded_nn))
    n_chunks = int(pl.cdiv(num_node, tn))

    in_tile = tb * tn * d * itemsize
    widen = tb * tn * d * 4 if itemsize < 4 else 0
    out_tile = _round_up(tb, sub) * 2 * _round_up(d, 128) * itemsize
    scratch = _round_up(tb, sub) * _round_up(d, 128) * (itemsize + 4)
    need = 2 * in_tile + 2 * out_tile + widen + scratch + (1 << 20)

    kernel = functools.partial(_cat_max_sum_chunked_kernel, num_node=num_node)
    return pl.pallas_call(
        kernel,
        out_shape=out_shape,
        grid=(bs // tb, n_chunks),
        in_specs=[pl.BlockSpec((tb, tn, d), lambda b, c: (b, c, 0))],
        out_specs=pl.BlockSpec((tb, 2 * d), lambda b, c: (b, 0)),
        scratch_shapes=[pltpu.VMEM((tb, d), x.dtype),      # running max
                        pltpu.VMEM((tb, d), jnp.float32)],  # fp32 sum
        compiler_params=pltpu.CompilerParams(
            dimension_semantics=("parallel", "arbitrary"),
            vmem_limit_bytes=_vmem_limit(need, cap)),
    )(x3)


class GNNPool:
    """JAX/Pallas port of GNNPool(readout)."""

    def __init__(self, readout: str):
        self.readout = readout.lower()
        if self.readout not in ("cat_max_sum", "identity"):
            # TODO(synk): 'mean'/'sum'/'max' ragged segment-scatter readouts
            # (global_mean/add/max_pool) are not ported to Pallas here.
            raise NotImplementedError(f"readout '{readout}' not implemented")

    def __call__(self, x: jax.Array, batch: jax.Array,
                 bs: int | None = None) -> jax.Array:
        if self.readout == "identity":
            return x
        if bs is None:
            # Mirrors the torch code (bs = max(unique(batch)) + 1). Forces a
            # device->host sync; prefer passing bs statically in hot paths.
            bs = int(jax.device_get(jnp.max(batch))) + 1
        return cat_max_sum_pallas(x, bs)


# ----------------------------------------------------------------------------
# Self-test
# ----------------------------------------------------------------------------

if __name__ == "__main__":
    key = jax.random.PRNGKey(0)

    def ref_fn(xa, b):
        xr = xa.reshape(b, -1, xa.shape[-1])
        sm = jnp.sum(xr.astype(jnp.float32), axis=1).astype(xa.dtype)
        return jnp.concatenate([jnp.max(xr, axis=1), sm], axis=-1)

    # 1) flat path, auto TB (bs=16, f32 -> TB=8, grid=(2,) even)
    bs, num_node, node_dim = 16, 16, 128
    x = jax.random.normal(key, (bs * num_node, node_dim), dtype=jnp.float32)
    batch = jnp.repeat(jnp.arange(bs, dtype=jnp.int32), num_node)
    ref = ref_fn(x, bs)
    out = jax.block_until_ready(cat_max_sum_pallas(x, bs))
    assert out.shape == (bs, 2 * node_dim)
    assert jnp.allclose(out, ref, atol=1e-5, rtol=1e-5)

    # 2) node-chunked reduction path with tail masking (num_node=40, TN=16)
    bs2, nn2 = 4, 40
    x2 = jax.random.normal(jax.random.PRNGKey(1), (bs2 * nn2, node_dim),
                           dtype=jnp.float32)
    out2 = jax.block_until_ready(cat_max_sum_pallas(x2, bs2, tn=16))
    assert jnp.allclose(out2, ref_fn(x2, bs2), atol=1e-5, rtol=1e-5)

    # 3) bf16 input with fp32 sum accumulation
    xb = x.astype(jnp.bfloat16)
    outb = jax.block_until_ready(cat_max_sum_pallas(xb, bs))
    refb = ref_fn(xb, bs)
    assert jnp.allclose(outb.astype(jnp.float32), refb.astype(jnp.float32),
                        atol=5e-2, rtol=5e-2)

    # 4) module wrapper (static bs) + identity passthrough
    pool = GNNPool("cat_max_sum")
    outw = jax.block_until_ready(pool(x, batch, bs=bs))
    assert jnp.allclose(outw, ref, atol=1e-5, rtol=1e-5)
    assert GNNPool("identity")(x, batch) is x

    print("KERNEL_OK")
</pallas_src>

<mosaic_0001>
module attributes {stable_mosaic.version = 11 : i64} {
  func.func @_cat_max_sum_kernel(%arg0: i32, %arg1: memref<8x16x128xf32, #tpu.memory_space<vmem>>, %arg2: memref<8x256xf32, #tpu.memory_space<vmem>>) attributes {dimension_semantics = [#tpu.dimension_semantics<parallel>], iteration_bounds = array<i64: 2>, scalar_prefetch = 0 : i64, scratch_operands = 0 : i64, tpu.core_type = #tpu.core_type<tc>, window_params = [{transform_indices = @transform_0, window_bounds = array<i64: 8, 16, 128>}, {transform_indices = @transform_1, window_bounds = array<i64: 8, 256>}]} {
    %c0 = arith.constant 0 : index
    %c0_0 = arith.constant 0 : index
    %c0_1 = arith.constant 0 : index
    %0 = vector.load %arg1[%c0, %c0_0, %c0_1] : memref<8x16x128xf32, #tpu.memory_space<vmem>>, vector<8x16x128xf32>
    %cst = arith.constant dense<0xFF800000> : vector<8x128xf32>
    %1 = vector.multi_reduction <maximumf>, %0, %cst [1] : vector<8x16x128xf32> to vector<8x128xf32>
    %c0_2 = arith.constant 0 : index
    %c0_3 = arith.constant 0 : index
    %2 = vector.load %arg2[%c0_2, %c0_3] : memref<8x256xf32, #tpu.memory_space<vmem>>, vector<8x128xf32>
    tpu.vector_store %arg2[%c0_2, %c0_3], %1 {strides = array<i32>} : memref<8x256xf32, #tpu.memory_space<vmem>>, vector<8x128xf32>,
    %cst_4 = arith.constant dense<0.000000e+00> : vector<8x128xf32>
    %3 = vector.multi_reduction <add>, %0, %cst_4 [1] : vector<8x16x128xf32> to vector<8x128xf32>
    %c0_5 = arith.constant 0 : index
    %c128 = arith.constant 128 : index
    %4 = vector.load %arg2[%c0_5, %c128] : memref<8x256xf32, #tpu.memory_space<vmem>>, vector<8x128xf32>
    tpu.vector_store %arg2[%c0_5, %c128], %3 {strides = array<i32>} : memref<8x256xf32, #tpu.memory_space<vmem>>, vector<8x128xf32>,
    return
  }
  func.func @transform_0(%arg0: i32) -> (i32, i32, i32) {
    %c0_i32 = arith.constant 0 : i32
    %c0_i32_0 = arith.constant 0 : i32
    %c0_i32_1 = arith.constant 0 : i32
    return %arg0, %c0_i32, %c0_i32_0 : i32, i32, i32
  }
  func.func @transform_1(%arg0: i32) -> (i32, i32) {
    %c0_i32 = arith.constant 0 : i32
    %c0_i32_0 = arith.constant 0 : i32
    return %arg0, %c0_i32 : i32, i32
  }
}

</mosaic_0001>

<llo_original>
// kernel: tpu_custom_call.1
$region0: #{tpu_custom_call.1}
  #allocation0 [shape = 'u32[]', space=smem, size = 0x4, offset = 0x4, fixed_abs, tag = 'smem constant byte address 0x4 - core index']
  #allocation1 [shape = 'u32[144,128]{1,0:T(1,128)}', space=vmem, size = 0x12000, scoped, tag = 'internal scratch']
  %s0 = inlined_call_operand.hbm [shape: f32[16,16,128], index: 0, kind: input, shape index: {}]
  %s1 = inlined_call_operand.hbm [shape: f32[16,256], index: 1, kind: output, shape index: {}]
  %s2 = sld [smem:[#allocation0]]
  $region41: #{tpu_custom_call.1} parent=0
    _
  %s4 = ssub.s32 1, %s2
  %s5 = scalar_select 0, %s4, %s2
  $region1: #{tpu_custom_call.1} parent=0
    #allocation2 [shape = 'u8[131072]{0}', space=vmem, size = 0x20000, scoped, tag = 'input window, operand 0']
    #allocation3 [shape = 's32[2]{0}', space=sflag, size = 0x8, scoped, tag = 'scoped memory for tpu_custom_call.1']
    #allocation4 [shape = 's32[2]{0}', space=sflag, size = 0x8, scoped, tag = 'scoped memory for tpu_custom_call.1']
    #allocation5 [shape = 'u8[16384]{0}', space=vmem, size = 0x4000, scoped, tag = 'output window, operand 0']
    %6 = vsyncpa [#allocation3], 0
    %s7 = scalar_lea.sflag [#allocation3], 1
    %8 = vsyncpa %s7, 0
    %9 = vsyncpa [#allocation4], 0
    %s10 = scalar_lea.sflag [#allocation4], 1
    %11 = vsyncpa %s10, 0
    loop: start=0, step=1, limit=4
    $region2: #{tpu_custom_call.1} parent=1 // loop_pre_header
      _
    $region3: #{tpu_custom_call.1} parent=1 // loop_header
      %s13 = sphi 0, %s17
      %p14 = scmp.ge.s32.totalorder %s13, 4
      %s23 = sphi 0, %s25
      %s26 = sphi 0, %s23
      %s27 = sphi 0, %s26
      %s43 = sphi 0, %s27
      %s49 = sphi 0, %s51
      %s52 = sphi 0, %s49
      %s53 = sphi 0, %s52
      %s69 = sphi 0, %s53
    $region4: #{tpu_custom_call.1} parent=1 // loop_header_branch
      %16 = sbr.rel (%p14) target = $region8
    $region5: #{tpu_custom_call.1} parent=1 // loop_body
      %s18 = ssub.s32 %s13, 1
      %s19 = ssub.s32 %s13, 2
      %s20 = sadd.s32 %s13, 1
      %s21 = ssub.s32 %s13, %s20
      %p22 = scmp.eq.s32.totalorder %s21, 0
      %s24 = sadd.s32 %s23, 1
      %s25 = scalar_select %p22, %s23, %s24
      %p28 = pneg %p22
      %p29 = scmp.eq.s32.totalorder %s13, 1
      %p30 = por %p28, %p29
      %p31 = scmp.ne.s32.totalorder %s23, %s26
      %p32 = scmp.eq.s32.totalorder %s13, 0
      %p33 = por %p31, %p32
      %p34 = scmp.ne.s32.totalorder %s23, %s26
      %p35 = scmp.eq.s32.totalorder %s18, 1
      %p36 = por %p34, %p35
      %p37 = scmp.ne.s32.totalorder %s26, %s27
      %p38 = scmp.eq.s32.totalorder %s18, 0
      %p39 = por %p37, %p38
      %p40 = scmp.ne.s32.totalorder %s26, %s27
      %p41 = scmp.eq.s32.totalorder %s19, 1
      %p42 = por %p40, %p41
      %p44 = scmp.ne.s32.totalorder %s27, %s43
      %p45 = scmp.eq.s32.totalorder %s19, 0
      %p46 = por %p44, %p45
      %s47 = ssub.s32 %s13, %s20
      %p48 = scmp.eq.s32.totalorder %s47, 0
      %s50 = sadd.s32 %s49, 1
      %s51 = scalar_select %p48, %s49, %s50
      %p54 = pneg %p48
      %p55 = scmp.eq.s32.totalorder %s13, 1
      %p56 = por %p54, %p55
      %p57 = scmp.ne.s32.totalorder %s49, %s52
      %p58 = scmp.eq.s32.totalorder %s13, 0
      %p59 = por %p57, %p58
      %p60 = scmp.ne.s32.totalorder %s49, %s52
      %p61 = scmp.eq.s32.totalorder %s18, 1
      %p62 = por %p60, %p61
      %p63 = scmp.ne.s32.totalorder %s52, %s53
      %p64 = scmp.eq.s32.totalorder %s18, 0
      %p65 = por %p63, %p64
      %p66 = scmp.ne.s32.totalorder %s52, %s53
      %p67 = scmp.eq.s32.totalorder %s19, 1
      %p68 = por %p66, %p67
      %p70 = scmp.ne.s32.totalorder %s53, %s69
      %p71 = scmp.eq.s32.totalorder %s19, 0
      %p72 = por %p70, %p71
      %p73 = scmp.le.s32.totalorder 1, %s13
      %p74 = scmp.lt.s32.totalorder %s13, 3
      %p75 = pnand %p73, %p74
      %p76 = pneg %p75
      // Predicated region
      $region9: #{tpu_custom_call.1} parent=5 // pred_check
        _
      $region10: #{tpu_custom_call.1} parent=5 // pred_check_branch
        %78 = sbr.rel (%p75) target = $region12
      $region11: #{tpu_custom_call.1} parent=5 // pred_region
        %s79 = ssub.s32 %s13, 1
      $region12: #{tpu_custom_call.1} parent=5 // pred_fallthru
        _
      %p80 = scmp.lt.s32.totalorder %s13, 2
      // Predicated region
      $region13: #{tpu_custom_call.1} parent=5 // pred_check
        %p81 = pneg %p80
      $region14: #{tpu_custom_call.1} parent=5 // pred_check_branch
        %83 = sbr.rel (%p81) target = $region16
      $region15: #{tpu_custom_call.1} parent=5 // pred_region
        // Predicated region
        $region17: #{tpu_custom_call.1} parent=15 // pred_check
          %p84 = pneg %p33
        $region18: #{tpu_custom_call.1} parent=15 // pred_check_branch
          %86 = sbr.rel (%p84) target = $region20
        $region19: #{tpu_custom_call.1} parent=15 // pred_region
          %s87 = sand.u32 %s23, 1
          %s88 = scalar_lea.sflag [#allocation3], %s87
          %s89 = sand.u32 %s23, 1
          %s90 = smul.addr %s89, 128
          %s91 = scalar_lea.vmem [#allocation2], %s90
          %s92 = smul.u32 8, %s13
          %s94 = ssub.s32 2048, 2048
          %95 = vsyncadd %s88, %s94
          %s96 = smul.addr %s92, 2
          %s97 = smul.addr %s96, 128
          %s98 = scalar_lea.hbm %s0, %s97
          %s99 = sshll.u32 %s91, 4
          %s100 = int_to_ptr.vmem [resolvable:$true] %s99
          %105 = dma.hbm_to_vmem [thread:$0]  %s98, 2048, %s100, %s88, 128, 128, 8
        $region20: #{tpu_custom_call.1} parent=15 // pred_fallthru
          _
      $region16: #{tpu_custom_call.1} parent=5 // pred_fallthru
        _
      %p106 = scmp.le.s32.totalorder 1, %s13
      %p107 = scmp.lt.s32.totalorder %s13, 3
      %p108 = pnand %p106, %p107
      %p109 = pneg %p108
      // Predicated region
      $region21: #{tpu_custom_call.1} parent=5 // pred_check
        _
      $region22: #{tpu_custom_call.1} parent=5 // pred_check_branch
        %111 = sbr.rel (%p108) target = $region24
      $region23: #{tpu_custom_call.1} parent=5 // pred_region
        %s112 = ssub.s32 %s13, 1
        %s113 = sand.u32 %s26, 1
        %s114 = scalar_lea.sflag [#allocation3], %s113
        %s115 = sand.u32 %s26, 1
        %s116 = smul.addr %s115, 128
        %s117 = scalar_lea.vmem [#allocation2], %s116
        // Predicated region
        $region25: #{tpu_custom_call.1} parent=23 // pred_check
          %p118 = pneg %p39
        $region26: #{tpu_custom_call.1} parent=23 // pred_check_branch
          %120 = sbr.rel (%p118) target = $region28
        $region27: #{tpu_custom_call.1} parent=23 // pred_region
          %121 = dma.done %s114, 2048
        $region28: #{tpu_custom_call.1} parent=23 // pred_fallthru
          _
        %s122 = sand.u32 %s26, 1
        %s123 = scalar_lea.sflag [#allocation3], %s122
        %s124 = sand.u32 %s26, 1
        %s125 = smul.addr %s124, 128
        %s126 = scalar_lea.vmem [#allocation2], %s125
        %p127 = pneg %p39
        %p128 = pneg %p36
        %p129 = pneg %p65
        %p130 = pneg %p62
        %s131 = sand.u32 %s52, 1
        %s132 = scalar_lea.sflag [#allocation4], %s131
        %s133 = sand.u32 %s52, 1
        %s134 = smul.addr %s133, 16
        %s135 = scalar_lea.vmem [#allocation5], %s134
        %s136 = smul.u32 8, %s18
        %v137 = vld [vmem:[%s117] sm:$0xff]
        %v138 = vld [vmem:[%s117 + $0x8] sm:$0xff]
        %v139 = vld [vmem:[%s117 + $0x10] sm:$0xff]
        %v140 = vld [vmem:[%s117 + $0x18] sm:$0xff]
        %v141 = vld [vmem:[%s117 + $0x20] sm:$0xff]
        %v142 = vld [vmem:[%s117 + $0x28] sm:$0xff]
        %v143 = vld [vmem:[%s117 + $0x30] sm:$0xff]
        %v144 = vld [vmem:[%s117 + $0x38] sm:$0xff]
        %v145 = vld [vmem:[%s117 + $0x40] sm:$0xff]
        %v146 = vld [vmem:[%s117 + $0x48] sm:$0xff]
        %v147 = vld [vmem:[%s117 + $0x50] sm:$0xff]
        %v148 = vld [vmem:[%s117 + $0x58] sm:$0xff]
        %v149 = vld [vmem:[%s117 + $0x60] sm:$0xff]
        %v150 = vld [vmem:[%s117 + $0x68] sm:$0xff]
        %v151 = vld [vmem:[%s117 + $0x70] sm:$0xff]
        %v152 = vld [vmem:[%s117 + $0x78] sm:$0xff]
        %v153 = vmax.f32 %v137, %v138
        %v154 = vrot.slane %v153, 4
        %v155 = vmax.f32 %v153, %v154
        %v156 = vrot.slane %v155, 2
        %v157 = vmax.f32 %v155, %v156
        %v158 = vrot.slane %v157, 1
        %v159 = vmax.f32 %v157, %v158
        %v160 = vmax.f32 %v139, %v140
        %v161 = vrot.slane %v160, 4
        %v162 = vmax.f32 %v160, %v161
        %v163 = vrot.slane %v162, 2
        %v164 = vmax.f32 %v162, %v163
        %v165 = vrot.slane %v164, 1
        %v166 = vmax.f32 %v164, %v165
        %v167 = vmax.f32 %v141, %v142
        %v168 = vrot.slane %v167, 4
        %v169 = vmax.f32 %v167, %v168
        %v170 = vrot.slane %v169, 2
        %v171 = vmax.f32 %v169, %v170
        %v172 = vrot.slane %v171, 1
        %v173 = vmax.f32 %v171, %v172
        %v174 = vmax.f32 %v143, %v144
        %v175 = vrot.slane %v174, 4
        %v176 = vmax.f32 %v174, %v175
        %v177 = vrot.slane %v176, 2
        %v178 = vmax.f32 %v176, %v177
        %v179 = vrot.slane %v178, 1
        %v180 = vmax.f32 %v178, %v179
        %v181 = vmax.f32 %v145, %v146
        %v182 = vrot.slane %v181, 4
        %v183 = vmax.f32 %v181, %v182
        %v184 = vrot.slane %v183, 2
        %v185 = vmax.f32 %v183, %v184
        %v186 = vrot.slane %v185, 1
        %v187 = vmax.f32 %v185, %v186
        %v188 = vmax.f32 %v147, %v148
        %v189 = vrot.slane %v188, 4
        %v190 = vmax.f32 %v188, %v189
        %v191 = vrot.slane %v190, 2
        %v192 = vmax.f32 %v190, %v191
        %v193 = vrot.slane %v192, 1
        %v194 = vmax.f32 %v192, %v193
        %v195 = vmax.f32 %v149, %v150
        %v196 = vrot.slane %v195, 4
        %v197 = vmax.f32 %v195, %v196
        %v198 = vrot.slane %v197, 2
        %v199 = vmax.f32 %v197, %v198
        %v200 = vrot.slane %v199, 1
        %v201 = vmax.f32 %v199, %v200
        %v202 = vmax.f32 %v151, %v152
        %v203 = vrot.slane %v202, 4
        %v204 = vmax.f32 %v202, %v203
        %v205 = vrot.slane %v204, 2
        %v206 = vmax.f32 %v204, %v205
        %v207 = vrot.slane %v206, 1
        %v208 = vmax.f32 %v206, %v207
        %vm217 = vcmask 1041409
        %v218 = vsel %vm217, %v166, %v159
        %vm219 = vcmask 1042434
        %v220 = vsel %vm219, %v173, %v218
        %vm221 = vcmask 1043459
        %v222 = vsel %vm221, %v180, %v220
        %vm223 = vcmask 1044484
        %v224 = vsel %vm223, %v187, %v222
        %vm225 = vcmask 1045509
        %v226 = vsel %vm225, %v194, %v224
        %vm227 = vcmask 1046534
        %v228 = vsel %vm227, %v201, %v226
        %vm229 = vcmask 1047559
        %v230 = vsel %vm229, %v208, %v228
        %232 = vst [vmem:[%s135] sm:$0xff] %v230
        %v233 = vadd.f32 %v137, %v138
        %v234 = vrot.slane %v233, 4
        %v235 = vadd.f32 %v233, %v234
        %v236 = vrot.slane %v235, 2
        %v237 = vadd.f32 %v235, %v236
        %v238 = vrot.slane %v237, 1
        %v239 = vadd.f32 %v237, %v238
        %v240 = vadd.f32 %v139, %v140
        %v241 = vrot.slane %v240, 4
        %v242 = vadd.f32 %v240, %v241
        %v243 = vrot.slane %v242, 2
        %v244 = vadd.f32 %v242, %v243
        %v245 = vrot.slane %v244, 1
        %v246 = vadd.f32 %v244, %v245
        %v247 = vadd.f32 %v141, %v142
        %v248 = vrot.slane %v247, 4
        %v249 = vadd.f32 %v247, %v248
        %v250 = vrot.slane %v249, 2
        %v251 = vadd.f32 %v249, %v250
        %v252 = vrot.slane %v251, 1
        %v253 = vadd.f32 %v251, %v252
        %v254 = vadd.f32 %v143, %v144
        %v255 = vrot.slane %v254, 4
        %v256 = vadd.f32 %v254, %v255
        %v257 = vrot.slane %v256, 2
        %v258 = vadd.f32 %v256, %v257
        %v259 = vrot.slane %v258, 1
        %v260 = vadd.f32 %v258, %v259
        %v261 = vadd.f32 %v145, %v146
        %v262 = vrot.slane %v261, 4
        %v263 = vadd.f32 %v261, %v262
        %v264 = vrot.slane %v263, 2
        %v265 = vadd.f32 %v263, %v264
        %v266 = vrot.slane %v265, 1
        %v267 = vadd.f32 %v265, %v266
        %v268 = vadd.f32 %v147, %v148
        %v269 = vrot.slane %v268, 4
        %v270 = vadd.f32 %v268, %v269
        %v271 = vrot.slane %v270, 2
        %v272 = vadd.f32 %v270, %v271
        %v273 = vrot.slane %v272, 1
        %v274 = vadd.f32 %v272, %v273
        %v275 = vadd.f32 %v149, %v150
        %v276 = vrot.slane %v275, 4
        %v277 = vadd.f32 %v275, %v276
        %v278 = vrot.slane %v277, 2
        %v279 = vadd.f32 %v277, %v278
        %v280 = vrot.slane %v279, 1
        %v281 = vadd.f32 %v279, %v280
        %v282 = vadd.f32 %v151, %v152
        %v283 = vrot.slane %v282, 4
        %v284 = vadd.f32 %v282, %v283
        %v285 = vrot.slane %v284, 2
        %v286 = vadd.f32 %v284, %v285
        %v287 = vrot.slane %v286, 1
        %v288 = vadd.f32 %v286, %v287
        %v297 = vsel %vm217, %v246, %v239
        %v298 = vsel %vm219, %v253, %v297
        %v299 = vsel %vm221, %v260, %v298
        %v300 = vsel %vm223, %v267, %v299
        %v301 = vsel %vm225, %v274, %v300
        %v302 = vsel %vm227, %v281, %v301
        %v303 = vsel %vm229, %v288, %v302
        %305 = vst [vmem:[%s135 + $0x8] sm:$0xff] %v303
        %s306 = sand.u32 %s52, 1
        %s307 = scalar_lea.sflag [#allocation4], %s306
        %s308 = sand.u32 %s52, 1
        %s309 = smul.addr %s308, 16
        %s310 = scalar_lea.vmem [#allocation5], %s309
        // Predicated region
        $region29: #{tpu_custom_call.1} parent=23 // pred_check
          %p311 = pneg %p62
        $region30: #{tpu_custom_call.1} parent=23 // pred_check_branch
          %313 = sbr.rel (%p311) target = $region32
        $region31: #{tpu_custom_call.1} parent=23 // pred_region
          %s315 = ssub.s32 256, 256
          %316 = vsyncadd %s307, %s315
          %s317 = smul.addr %s18, 2
          %s318 = smul.addr %s317, 128
          %s319 = scalar_lea.hbm %s1, %s318
          %s321 = sshll.u32 %s310, 4
          %s322 = int_to_ptr.vmem [resolvable:$true] %s321
          %324 = dma.vmem_to_hbm [thread:$0]  %s322, 256, %s319, %s307
        $region32: #{tpu_custom_call.1} parent=23 // pred_fallthru
          _
      $region24: #{tpu_custom_call.1} parent=5 // pred_fallthru
        _
      %p325 = scmp.le.s32.totalorder 2, %s13
      // Predicated region
      $region33: #{tpu_custom_call.1} parent=5 // pred_check
        %p326 = pneg %p325
      $region34: #{tpu_custom_call.1} parent=5 // pred_check_branch
        %328 = sbr.rel (%p326) target = $region36
      $region35: #{tpu_custom_call.1} parent=5 // pred_region
        %s329 = ssub.s32 %s13, 2
        // Predicated region
        $region37: #{tpu_custom_call.1} parent=35 // pred_check
          %p330 = pneg %p68
        $region38: #{tpu_custom_call.1} parent=35 // pred_check_branch
          %332 = sbr.rel (%p330) target = $region40
        $region39: #{tpu_custom_call.1} parent=35 // pred_region
          %s333 = sand.u32 %s53, 1
          %s334 = scalar_lea.sflag [#allocation4], %s333
          %s335 = sand.u32 %s53, 1
          %s336 = smul.addr %s335, 16
          %s337 = scalar_lea.vmem [#allocation5], %s336
          %338 = dma.done %s334, 256
        $region40: #{tpu_custom_call.1} parent=35 // pred_fallthru
          _
      $region36: #{tpu_custom_call.1} parent=5 // pred_fallthru
        _
    $region6: #{tpu_custom_call.1} parent=1 // loop_footer
      %s17 = sadd.s32 1, %s13
    $region7: #{tpu_custom_call.1} parent=1 // loop_footer_branch
      %12 = sbr.rel target = $region3
    $region8: #{tpu_custom_call.1} parent=1 // loop_exit
      _
    %339 = vsyncpa [#allocation3], 1
    %s340 = scalar_lea.sflag [#allocation3], 1
    %341 = vsyncpa %s340, 1
    %342 = vsyncpa [#allocation4], 1
    %s343 = scalar_lea.sflag [#allocation4], 1
    %344 = vsyncpa %s343, 1

</llo_original>
